<compile_context>
chip_gen: v7x
topology: tpu7x:2x2x1
jax: 0.10.0
libtpu: 0.0.40
codegen_flags: <defaults>
</compile_context>

<pallas_src>
import functools

import jax
import jax.numpy as jnp
from jax import lax
from jax.experimental import pallas as pl
from jax.experimental.pallas import tpu as pltpu


# ----------------------------- dropout hash ---------------------------------
def _wrap_i32(v):
    v &= 0xFFFFFFFF
    return v - (1 << 32) if v >= (1 << 31) else v


_C_ROW = _wrap_i32(0x9E3779B1)
_C_COL = _wrap_i32(0x85EBCA77)
_C_SEED = _wrap_i32(0xC2B2AE3D)
_C_M1 = _wrap_i32(0x7FEB352D)
_C_M2 = _wrap_i32(0x846CA68B)


def _hash_keep_mask(seed, rows, cols, p):
    """Bernoulli(1-p) keep-mask from a counter-based int32 hash (pure jnp ops)."""
    h = rows * jnp.int32(_C_ROW) + cols * jnp.int32(_C_COL) + seed * jnp.int32(_C_SEED)
    h = h ^ (h >> 16)
    h = h * jnp.int32(_C_M1)
    h = h ^ (h >> 13)
    h = h * jnp.int32(_C_M2)
    h = h ^ (h >> 16)
    h = h & jnp.int32(0x7FFFFFFF)                       # uniform-ish in [0, 2^31)
    thresh = jnp.int32(min(int(p * (1 << 31)), (1 << 31) - 1))
    return h >= thresh


# ------------------------------- kernel --------------------------------------
def _make_ffn_kernel(p, training, tile_n, tile_h, compute_dtype):
    p = float(p)

    def kernel(seed_ref, x_ref, w1_ref, b1_ref, w2_ref, b2_ref, o_ref, acc_ref):
        k = pl.program_id(1)
        nk = pl.num_programs(1)

        @pl.when(k == 0)
        def _init():
            # Fold the fc2 bias into the accumulator init (saves a VPU pass).
            acc_ref[...] = jnp.broadcast_to(
                b2_ref[...].astype(jnp.float32), acc_ref.shape)

        # ---- fc1 chunk: (TILE_N, D) @ (D, TILE_H) on the MXU, f32 accumulate ----
        h = jnp.dot(x_ref[...].astype(compute_dtype),
                    w1_ref[...].astype(compute_dtype),
                    preferred_element_type=jnp.float32)
        h = h + b1_ref[...].astype(jnp.float32)
        h = jnp.maximum(h, 0.0)                          # ReLU (VPU, f32)

        # ---- inverted dropout (training only) ----
        if training and p > 0.0:
            if p >= 1.0:
                h = jnp.zeros_like(h)
            else:
                rows = (lax.broadcasted_iota(jnp.int32, h.shape, 0)
                        + pl.program_id(0) * tile_n)
                cols = (lax.broadcasted_iota(jnp.int32, h.shape, 1)
                        + k * tile_h)
                keep = _hash_keep_mask(seed_ref[0], rows, cols, p)
                h = jnp.where(keep, h * (1.0 / (1.0 - p)), 0.0)

        # ---- fc2 partial product: (TILE_N, TILE_H) @ (TILE_H, D) into f32 acc ----
        acc_ref[...] += jnp.dot(h.astype(compute_dtype),
                                w2_ref[...].astype(compute_dtype),
                                preferred_element_type=jnp.float32)

        @pl.when(k == nk - 1)
        def _finalize():
            o_ref[...] = acc_ref[...].astype(o_ref.dtype)

    return kernel


# ------------------------------- wrapper --------------------------------------
def _round_up(n, m):
    return (n + m - 1) // m * m


def _pad2d(a, shape):
    pads = [(0, t - s) for s, t in zip(a.shape, shape)]
    if all(p == (0, 0) for p in pads):
        return a
    return jnp.pad(a, pads)


@functools.partial(
    jax.jit,
    static_argnames=("p", "training", "tile_n", "tile_h", "compute_dtype"))
def transformer_feed_forward(x, w1, b1, w2, b2, seed, *, p=0.1, training=False,
                             tile_n=256, tile_h=512, compute_dtype=None):
    """x: (..., model).  w1: (model, hidden), w2: (hidden, model), biases (1, dim)."""
    orig_shape = x.shape
    D = x.shape[-1]
    H = w1.shape[1]
    if compute_dtype is None:
        compute_dtype = x.dtype

    x2 = x.reshape(-1, D)
    N = x2.shape[0]

    # (8,128)-aligned, lane-dense padded dims.  Padding is inert (zero rows/cols).
    D_pad = _round_up(D, 128)
    tn = _round_up(min(tile_n, _round_up(N, 8)), 8)
    N_pad = _round_up(N, tn)
    H_pad = _round_up(H, 128)
    th = _round_up(min(tile_h, H_pad), 128)
    H_pad = _round_up(H_pad, th)

    x_p = _pad2d(x2, (N_pad, D_pad))
    w1_p = _pad2d(w1, (D_pad, H_pad))
    b1_p = _pad2d(b1.reshape(1, -1), (1, H_pad))
    w2_p = _pad2d(w2, (H_pad, D_pad))
    b2_p = _pad2d(b2.reshape(1, -1), (1, D_pad))
    seed = seed.reshape(-1).astype(jnp.int32)

    grid = (N_pad // tn, H_pad // th)

    flops = 4 * N_pad * D_pad * H_pad                    # two matmuls
    bytes_accessed = int(
        x_p.size * x_p.dtype.itemsize + w1_p.size * w1_p.dtype.itemsize
        + b1_p.size * b1_p.dtype.itemsize + w2_p.size * w2_p.dtype.itemsize
        + b2_p.size * b2_p.dtype.itemsize + N_pad * D_pad * x.dtype.itemsize)

    out = pl.pallas_call(
        _make_ffn_kernel(p, training, tn, th, compute_dtype),
        out_shape=jax.ShapeDtypeStruct((N_pad, D_pad), x.dtype),
        grid_spec=pltpu.PrefetchScalarGridSpec(
            num_scalar_prefetch=1,                        # dropout seed -> SMEM
            grid=grid,
            in_specs=[
                pl.BlockSpec((tn, D_pad), lambda i, k, s: (i, 0)),   # x  (resident over k)
                pl.BlockSpec((D_pad, th), lambda i, k, s: (0, k)),   # w1 (streamed over k)
                pl.BlockSpec((1, th),     lambda i, k, s: (0, k)),   # b1
                pl.BlockSpec((th, D_pad), lambda i, k, s: (k, 0)),   # w2 (streamed over k)
                pl.BlockSpec((1, D_pad),  lambda i, k, s: (0, 0)),   # b2
            ],
            out_specs=pl.BlockSpec((tn, D_pad), lambda i, k, s: (i, 0)),
            scratch_shapes=[pltpu.VMEM((tn, D_pad), jnp.float32)],   # fc2 accumulator
        ),
        compiler_params=pltpu.CompilerParams(
            dimension_semantics=("parallel", "arbitrary"),  # rows across TCs on v7x
            vmem_limit_bytes=48 * 1024 * 1024),
        cost_estimate=pl.CostEstimate(
            flops=flops, transcendentals=0, bytes_accessed=bytes_accessed),
    )(seed, x_p, w1_p, b1_p, w2_p, b2_p)

    return out[:N, :D].reshape(orig_shape)


def init_params(key, model_size, hidden_size, dtype=jnp.float32):
    """nn.Linear-style U(-1/sqrt(fan_in), 1/sqrt(fan_in)) init; weights stored as
    (in, out), i.e. transposed w.r.t. PyTorch's (out, in) layout."""
    k1, k2, k3, k4 = jax.random.split(key, 4)
    lim1 = 1.0 / (model_size ** 0.5)
    lim2 = 1.0 / (hidden_size ** 0.5)
    w1 = jax.random.uniform(k1, (model_size, hidden_size), dtype, -lim1, lim1)
    b1 = jax.random.uniform(k2, (1, hidden_size), dtype, -lim1, lim1)
    w2 = jax.random.uniform(k3, (hidden_size, model_size), dtype, -lim2, lim2)
    b2 = jax.random.uniform(k4, (1, model_size), dtype, -lim2, lim2)
    return w1, b1, w2, b2


if __name__ == "__main__":
    batch, seq, model_size, hidden_size = 2, 8, 128, 256
    dropout_p = 0.1

    key = jax.random.PRNGKey(0)
    kx, kp = jax.random.split(key)
    x = jax.random.normal(kx, (batch, seq, model_size), jnp.float32)
    w1, b1, w2, b2 = init_params(kp, model_size, hidden_size)
    seed = jnp.array([42], dtype=jnp.int32)

    ref = jnp.maximum(x @ w1 + b1[0], 0.0) @ w2 + b2[0]

    # 1) eval mode, f32 compute; small tiles so the row x hidden grid and the fc2
    #    accumulator path are actually exercised (grid = (2, 2)).
    y_eval = transformer_feed_forward(x, w1, b1, w2, b2, seed, p=dropout_p,
                                      training=False, tile_n=8, tile_h=128)
    jax.block_until_ready(y_eval)
    assert y_eval.shape == x.shape
    assert jnp.allclose(y_eval, ref, atol=1e-3, rtol=1e-3)

    # 2) eval mode, bf16 MXU path (the perf path on v5e/v6e/v7x); looser tolerance.
    y_bf16 = transformer_feed_forward(x, w1, b1, w2, b2, seed, p=dropout_p,
                                      training=False, compute_dtype=jnp.bfloat16)
    jax.block_until_ready(y_bf16)
    assert jnp.allclose(y_bf16, ref, atol=1e-1, rtol=1e-1)

    # 3) training mode: in-kernel hash dropout.  The mask depends only on
    #    (seed, global row, global col), so different tilings must agree.
    y_tr_a = transformer_feed_forward(x, w1, b1, w2, b2, seed, p=dropout_p,
                                      training=True, tile_n=8, tile_h=128)
    y_tr_b = transformer_feed_forward(x, w1, b1, w2, b2, seed, p=dropout_p,
                                      training=True)
    jax.block_until_ready((y_tr_a, y_tr_b))
    assert y_tr_a.shape == x.shape
    assert bool(jnp.all(jnp.isfinite(y_tr_a)))
    assert jnp.allclose(y_tr_a, y_tr_b, atol=1e-4, rtol=1e-4)
    assert not jnp.allclose(y_tr_a, y_eval, atol=1e-6, rtol=0.0)  # dropout did something

    print("KERNEL_OK")
</pallas_src>

<mosaic_0001>
module attributes {stable_mosaic.version = 11 : i64} {
  func.func @kernel(%arg0: i32, %arg1: i32, %arg2: memref<1xi32, #tpu.memory_space<smem>>, %arg3: memref<8x128xf32, #tpu.memory_space<vmem>>, %arg4: memref<128x128xf32, #tpu.memory_space<vmem>>, %arg5: memref<1x128xf32, #tpu.memory_space<vmem>>, %arg6: memref<128x128xf32, #tpu.memory_space<vmem>>, %arg7: memref<1x128xf32, #tpu.memory_space<vmem>>, %arg8: memref<8x128xf32, #tpu.memory_space<vmem>>, %arg9: memref<8x128xf32, #tpu.memory_space<vmem>>) attributes {dimension_semantics = [#tpu.dimension_semantics<parallel>, #tpu.dimension_semantics<arbitrary>], iteration_bounds = array<i64: 2, 2>, scalar_prefetch = 1 : i64, scratch_operands = 1 : i64, tpu.core_type = #tpu.core_type<tc>, window_params = [{transform_indices = @transform_0, window_bounds = array<i64: 8, 128>}, {transform_indices = @transform_1, window_bounds = array<i64: 128, 128>}, {transform_indices = @transform_2, window_bounds = array<i64: 1, 128>}, {transform_indices = @transform_3, window_bounds = array<i64: 128, 128>}, {pipeline_mode = #tpu.pipeline_mode<synchronous>, transform_indices = @transform_4, window_bounds = array<i64: 1, 128>}, {transform_indices = @transform_5, window_bounds = array<i64: 8, 128>}]} {
    %c0_i32 = arith.constant 0 : i32
    %0 = arith.cmpi eq, %arg1, %c0_i32 : i32
    %1 = arith.extui %0 : i1 to i32
    %c0_i32_0 = arith.constant 0 : i32
    %2 = arith.cmpi ne, %1, %c0_i32_0 : i32
    scf.if %2 {
      %c0_15 = arith.constant 0 : index
      %c0_16 = arith.constant 0 : index
      %19 = vector.load %arg7[%c0_15, %c0_16] : memref<1x128xf32, #tpu.memory_space<vmem>>, vector<1x128xf32>
      %20 = vector.shape_cast %19 : vector<1x128xf32> to vector<1x128xf32>
      %21 = vector.broadcast %20 : vector<1x128xf32> to vector<8x128xf32>
      %c0_17 = arith.constant 0 : index
      %c0_18 = arith.constant 0 : index
      %22 = vector.load %arg9[%c0_17, %c0_18] : memref<8x128xf32, #tpu.memory_space<vmem>>, vector<8x128xf32>
      tpu.vector_store %arg9[%c0_17, %c0_18], %21 {strides = array<i32>} : memref<8x128xf32, #tpu.memory_space<vmem>>, vector<8x128xf32>,
    } else {
    }
    %c0 = arith.constant 0 : index
    %c0_1 = arith.constant 0 : index
    %3 = vector.load %arg3[%c0, %c0_1] : memref<8x128xf32, #tpu.memory_space<vmem>>, vector<8x128xf32>
    %c0_2 = arith.constant 0 : index
    %c0_3 = arith.constant 0 : index
    %4 = vector.load %arg4[%c0_2, %c0_3] : memref<128x128xf32, #tpu.memory_space<vmem>>, vector<128x128xf32>
    %cst = arith.constant dense<0.000000e+00> : vector<8x128xf32>
    %5 = tpu.matmul %3, %4, %cst {dimension_numbers = #tpu.dot_dimension_numbers<[1], [0], [0], [1], [0, 0, 1, 1], [], []>} : vector<8x128xf32>, vector<128x128xf32>, vector<8x128xf32> -> vector<8x128xf32>
    %c0_4 = arith.constant 0 : index
    %c0_5 = arith.constant 0 : index
    %6 = vector.load %arg5[%c0_4, %c0_5] : memref<1x128xf32, #tpu.memory_space<vmem>>, vector<1x128xf32>
    %7 = vector.broadcast %6 : vector<1x128xf32> to vector<8x128xf32>
    %8 = arith.addf %5, %7 : vector<8x128xf32>
    %cst_6 = arith.constant 0.000000e+00 : f32
    %9 = vector.broadcast %cst_6 : f32 to vector<8x128xf32>
    %10 = arith.maximumf %8, %9 : vector<8x128xf32>
    %c0_7 = arith.constant 0 : index
    %c0_8 = arith.constant 0 : index
    %11 = vector.load %arg9[%c0_7, %c0_8] : memref<8x128xf32, #tpu.memory_space<vmem>>, vector<8x128xf32>
    %c0_9 = arith.constant 0 : index
    %c0_10 = arith.constant 0 : index
    %12 = vector.load %arg6[%c0_9, %c0_10] : memref<128x128xf32, #tpu.memory_space<vmem>>, vector<128x128xf32>
    %cst_11 = arith.constant dense<0.000000e+00> : vector<8x128xf32>
    %13 = tpu.matmul %10, %12, %cst_11 {dimension_numbers = #tpu.dot_dimension_numbers<[1], [0], [0], [1], [0, 0, 1, 1], [], []>} : vector<8x128xf32>, vector<128x128xf32>, vector<8x128xf32> -> vector<8x128xf32>
    %14 = arith.addf %11, %13 : vector<8x128xf32>
    %c0_12 = arith.constant 0 : index
    %c0_13 = arith.constant 0 : index
    %15 = vector.load %arg9[%c0_12, %c0_13] : memref<8x128xf32, #tpu.memory_space<vmem>>, vector<8x128xf32>
    tpu.vector_store %arg9[%c0_12, %c0_13], %14 {strides = array<i32>} : memref<8x128xf32, #tpu.memory_space<vmem>>, vector<8x128xf32>,
    %c1_i32 = arith.constant 1 : i32
    %16 = arith.cmpi eq, %arg1, %c1_i32 : i32
    %17 = arith.extui %16 : i1 to i32
    %c0_i32_14 = arith.constant 0 : i32
    %18 = arith.cmpi ne, %17, %c0_i32_14 : i32
    scf.if %18 {
      %c0_15 = arith.constant 0 : index
      %c0_16 = arith.constant 0 : index
      %19 = vector.load %arg9[%c0_15, %c0_16] : memref<8x128xf32, #tpu.memory_space<vmem>>, vector<8x128xf32>
      %c0_17 = arith.constant 0 : index
      %c0_18 = arith.constant 0 : index
      %20 = vector.load %arg8[%c0_17, %c0_18] : memref<8x128xf32, #tpu.memory_space<vmem>>, vector<8x128xf32>
      tpu.vector_store %arg8[%c0_17, %c0_18], %19 {strides = array<i32>} : memref<8x128xf32, #tpu.memory_space<vmem>>, vector<8x128xf32>,
    } else {
    }
    return
  }
  func.func @transform_0(%arg0: i32, %arg1: i32, %arg2: memref<1xi32, #tpu.memory_space<smem>>) -> (i32, i32) {
    %c0_i32 = arith.constant 0 : i32
    %c0_i32_0 = arith.constant 0 : i32
    return %arg0, %c0_i32 : i32, i32
  }
  func.func @transform_1(%arg0: i32, %arg1: i32, %arg2: memref<1xi32, #tpu.memory_space<smem>>) -> (i32, i32) {
    %c0_i32 = arith.constant 0 : i32
    %c0_i32_0 = arith.constant 0 : i32
    return %c0_i32, %arg1 : i32, i32
  }
  func.func @transform_2(%arg0: i32, %arg1: i32, %arg2: memref<1xi32, #tpu.memory_space<smem>>) -> (i32, i32) {
    %c0_i32 = arith.constant 0 : i32
    %c0_i32_0 = arith.constant 0 : i32
    return %c0_i32, %arg1 : i32, i32
  }
  func.func @transform_3(%arg0: i32, %arg1: i32, %arg2: memref<1xi32, #tpu.memory_space<smem>>) -> (i32, i32) {
    %c0_i32 = arith.constant 0 : i32
    %c0_i32_0 = arith.constant 0 : i32
    return %arg1, %c0_i32 : i32, i32
  }
  func.func @transform_4(%arg0: i32, %arg1: i32, %arg2: memref<1xi32, #tpu.memory_space<smem>>) -> (i32, i32) {
    %c0_i32 = arith.constant 0 : i32
    %c0_i32_0 = arith.constant 0 : i32
    %c0_i32_1 = arith.constant 0 : i32
    return %c0_i32, %c0_i32_0 : i32, i32
  }
  func.func @transform_5(%arg0: i32, %arg1: i32, %arg2: memref<1xi32, #tpu.memory_space<smem>>) -> (i32, i32) {
    %c0_i32 = arith.constant 0 : i32
    %c0_i32_0 = arith.constant 0 : i32
    return %arg0, %c0_i32 : i32, i32
  }
}

</mosaic_0001>

<llo_original>
// kernel: transformer_feed_forward.1
$region0: #{transformer_feed_forward.1}
  #allocation0 [shape = 'u32[]', space=smem, size = 0x4, offset = 0x4, fixed_abs, tag = 'smem constant byte address 0x4 - core index']
  #allocation1 [shape = 'u32[144,128]{1,0:T(1,128)}', space=vmem, size = 0x12000, scoped, tag = 'internal scratch']
  #allocation2 [shape = 'f32[8,128]{1,0:T(8,128)}', space=vmem, size = 0x1000, scoped, tag = 'scratch operand']
  #allocation3 [shape = 's32[1]{0}', space=sflag, size = 0x4, scoped, tag = 'scoped memory for transformer_feed_forward.1']
  #allocation4 [shape = 's32[1]{0:T(128)S(6)}', space=smem, size = 0x200, scoped, tag = 'prefetched SMEM operand 0']
  %s0 = inlined_call_operand.<no memory space> [shape: s32[1], index: 0, kind: input, shape index: {}]
  %s1 = inlined_call_operand.hbm [shape: f32[16,128], index: 1, kind: input, shape index: {}]
  %s2 = inlined_call_operand.hbm [shape: f32[128,256], index: 2, kind: input, shape index: {}]
  %s3 = inlined_call_operand.vmem [shape: f32[1,256], index: 3, kind: input, shape index: {}]
  %s4 = inlined_call_operand.hbm [shape: f32[256,128], index: 4, kind: input, shape index: {}]
  %s5 = inlined_call_operand.vmem [shape: f32[1,128], index: 5, kind: input, shape index: {}]
  %s6 = inlined_call_operand.hbm [shape: f32[16,128], index: 6, kind: output, shape index: {}]
  %s7 = sld [smem:[#allocation0]]
  $region73: #{transformer_feed_forward.1} parent=0
    _
  %s9 = ssub.s32 1, %s7
  %s10 = scalar_select 0, %s9, %s7
  %11 = sst [smem:[#allocation4]] %s0
  $region1: #{transformer_feed_forward.1} parent=0
    #allocation5 [shape = 'u8[8192]{0}', space=vmem, size = 0x2000, scoped, tag = 'input window, operand 1']
    #allocation6 [shape = 's32[2]{0}', space=sflag, size = 0x8, scoped, tag = 'scoped memory for transformer_feed_forward.1']
    #allocation7 [shape = 's32[2]{0}', space=sflag, size = 0x8, scoped, tag = 'scoped memory for transformer_feed_forward.1']
    #allocation8 [shape = 'u8[131072]{0}', space=vmem, size = 0x20000, scoped, tag = 'input window, operand 2']
    #allocation9 [shape = 's32[2]{0}', space=sflag, size = 0x8, scoped, tag = 'scoped memory for transformer_feed_forward.1']
    #allocation10 [shape = 'u8[131072]{0}', space=vmem, size = 0x20000, scoped, tag = 'input window, operand 4']
    #allocation11 [shape = 'u8[8192]{0}', space=vmem, size = 0x2000, scoped, tag = 'output window, operand 0']
    %12 = vsyncpa [#allocation6], 0
    %s13 = scalar_lea.sflag [#allocation6], 1
    %14 = vsyncpa %s13, 0
    %15 = vsyncpa [#allocation9], 0
    %s16 = scalar_lea.sflag [#allocation9], 1
    %17 = vsyncpa %s16, 0
    %18 = vsyncpa [#allocation7], 0
    %s19 = scalar_lea.sflag [#allocation7], 1
    %20 = vsyncpa %s19, 0
    loop: start=0, step=1, limit=6
    $region2: #{transformer_feed_forward.1} parent=1 // loop_pre_header
      _
    $region3: #{transformer_feed_forward.1} parent=1 // loop_header
      %s22 = sphi 0, %s26
      %p23 = scmp.ge.s32.totalorder %s22, 6
      %s29 = sphi 0, %s41
      %s30 = sphi 0, %s37
      %s31 = sphi 0, %s29
      %s32 = sphi 0, %s30
      %s33 = sphi 0, %s31
      %s34 = sphi 0, %s32
      %s44 = sphi 0, %s46
      %s47 = sphi 0, %s44
      %s48 = sphi 0, %s47
      %s64 = sphi 0, %s48
      %s70 = sphi 0, %s72
      %s73 = sphi 0, %s70
      %s74 = sphi 0, %s73
      %s90 = sphi 0, %s74
      %s96 = sphi 0, %s98
      %s99 = sphi 0, %s96
      %s100 = sphi 0, %s99
      %s116 = sphi 0, %s100
      %s122 = sphi 0, %s124
      %s125 = sphi 0, %s122
      %s126 = sphi 0, %s125
      %s142 = sphi 0, %s126
      %s146 = sphi 0, %s146
      %s148 = sphi 0, %s146
      %s149 = sphi 0, %s148
      %s163 = sphi 0, %s149
      %s169 = sphi 0, %s171
      %s172 = sphi 0, %s169
      %s173 = sphi 0, %s172
      %s189 = sphi 0, %s173
    $region4: #{transformer_feed_forward.1} parent=1 // loop_header_branch
      %25 = sbr.rel (%p23) target = $region8
    $region5: #{transformer_feed_forward.1} parent=1 // loop_body
      %s27 = ssub.s32 %s22, 1
      %s28 = ssub.s32 %s22, 2
      %s35 = sadd.s32 1, %s30
      %p36 = scmp.ge.s32.totalorder %s35, 2
      %s37 = scalar_select %p36, 0, %s35
      %s38 = sadd.s32 1, %s29
      %s39 = scalar_select %p36, %s38, %s29
      %p40 = scmp.ge.s32.totalorder %s39, 2
      %s41 = scalar_select %p40, 0, %s39
      %s42 = ssub.s32 %s29, %s41
      %p43 = scmp.eq.s32.totalorder %s42, 0
      %s45 = sadd.s32 %s44, 1
      %s46 = scalar_select %p43, %s44, %s45
      %p49 = pneg %p43
      %p50 = scmp.eq.s32.totalorder %s22, 3
      %p51 = por %p49, %p50
      %p52 = scmp.ne.s32.totalorder %s44, %s47
      %p53 = scmp.eq.s32.totalorder %s22, 0
      %p54 = por %p52, %p53
      %p55 = scmp.ne.s32.totalorder %s44, %s47
      %p56 = scmp.eq.s32.totalorder %s27, 3
      %p57 = por %p55, %p56
      %p58 = scmp.ne.s32.totalorder %s47, %s48
      %p59 = scmp.eq.s32.totalorder %s27, 0
      %p60 = por %p58, %p59
      %p61 = scmp.ne.s32.totalorder %s47, %s48
      %p62 = scmp.eq.s32.totalorder %s28, 3
      %p63 = por %p61, %p62
      %p65 = scmp.ne.s32.totalorder %s48, %s64
      %p66 = scmp.eq.s32.totalorder %s28, 0
      %p67 = por %p65, %p66
      %s68 = ssub.s32 %s30, %s37
      %p69 = scmp.eq.s32.totalorder %s68, 0
      %s71 = sadd.s32 %s70, 1
      %s72 = scalar_select %p69, %s70, %s71
      %p75 = pneg %p69
      %p76 = scmp.eq.s32.totalorder %s22, 3
      %p77 = por %p75, %p76
      %p78 = scmp.ne.s32.totalorder %s70, %s73
      %p79 = scmp.eq.s32.totalorder %s22, 0
      %p80 = por %p78, %p79
      %p81 = scmp.ne.s32.totalorder %s70, %s73
      %p82 = scmp.eq.s32.totalorder %s27, 3
      %p83 = por %p81, %p82
      %p84 = scmp.ne.s32.totalorder %s73, %s74
      %p85 = scmp.eq.s32.totalorder %s27, 0
      %p86 = por %p84, %p85
      %p87 = scmp.ne.s32.totalorder %s73, %s74
      %p88 = scmp.eq.s32.totalorder %s28, 3
      %p89 = por %p87, %p88
      %p91 = scmp.ne.s32.totalorder %s74, %s90
      %p92 = scmp.eq.s32.totalorder %s28, 0
      %p93 = por %p91, %p92
      %s94 = ssub.s32 %s30, %s37
      %p95 = scmp.eq.s32.totalorder %s94, 0
      %s97 = sadd.s32 %s96, 1
      %s98 = scalar_select %p95, %s96, %s97
      %p101 = pneg %p95
      %p102 = scmp.eq.s32.totalorder %s22, 3
      %p103 = por %p101, %p102
      %p104 = scmp.ne.s32.totalorder %s96, %s99
      %p105 = scmp.eq.s32.totalorder %s22, 0
      %p106 = por %p104, %p105
      %p107 = scmp.ne.s32.totalorder %s96, %s99
      %p108 = scmp.eq.s32.totalorder %s27, 3
      %p109 = por %p107, %p108
      %p110 = scmp.ne.s32.totalorder %s99, %s100
      %p111 = scmp.eq.s32.totalorder %s27, 0
      %p112 = por %p110, %p111
      %p113 = scmp.ne.s32.totalorder %s99, %s100
      %p114 = scmp.eq.s32.totalorder %s28, 3
      %p115 = por %p113, %p114
      %p117 = scmp.ne.s32.totalorder %s100, %s116
      %p118 = scmp.eq.s32.totalorder %s28, 0
      %p119 = por %p117, %p118
      %s120 = ssub.s32 %s30, %s37
      %p121 = scmp.eq.s32.totalorder %s120, 0
      %s123 = sadd.s32 %s122, 1
      %s124 = scalar_select %p121, %s122, %s123
      %p127 = pneg %p121
      %p128 = scmp.eq.s32.totalorder %s22, 3
      %p129 = por %p127, %p128
      %p130 = scmp.ne.s32.totalorder %s122, %s125
      %p131 = scmp.eq.s32.totalorder %s22, 0
      %p132 = por %p130, %p131
      %p133 = scmp.ne.s32.totalorder %s122, %s125
      %p134 = scmp.eq.s32.totalorder %s27, 3
      %p135 = por %p133, %p134
      %p136 = scmp.ne.s32.totalorder %s125, %s126
      %p137 = scmp.eq.s32.totalorder %s27, 0
      %p138 = por %p136, %p137
      %p139 = scmp.ne.s32.totalorder %s125, %s126
      %p140 = scmp.eq.s32.totalorder %s28, 3
      %p141 = por %p139, %p140
      %p143 = scmp.ne.s32.totalorder %s126, %s142
      %p144 = scmp.eq.s32.totalorder %s28, 0
      %p145 = por %p143, %p144
      %s147 = sadd.s32 %s146, 1
      %p150 = scmp.eq.s32.totalorder %s22, 3
      %p151 = scmp.ne.s32.totalorder %s146, %s148
      %p152 = scmp.eq.s32.totalorder %s22, 0
      %p153 = por %p151, %p152
      %p154 = scmp.ne.s32.totalorder %s146, %s148
      %p155 = scmp.eq.s32.totalorder %s27, 3
      %p156 = por %p154, %p155
      %p157 = scmp.ne.s32.totalorder %s148, %s149
      %p158 = scmp.eq.s32.totalorder %s27, 0
      %p159 = por %p157, %p158
      %p160 = scmp.ne.s32.totalorder %s148, %s149
      %p161 = scmp.eq.s32.totalorder %s28, 3
      %p162 = por %p160, %p161
      %p164 = scmp.ne.s32.totalorder %s149, %s163
      %p165 = scmp.eq.s32.totalorder %s28, 0
      %p166 = por %p164, %p165
      %s167 = ssub.s32 %s29, %s41
      %p168 = scmp.eq.s32.totalorder %s167, 0
      %s170 = sadd.s32 %s169, 1
      %s171 = scalar_select %p168, %s169, %s170
      %p174 = pneg %p168
      %p175 = scmp.eq.s32.totalorder %s22, 3
      %p176 = por %p174, %p175
      %p177 = scmp.ne.s32.totalorder %s169, %s172
      %p178 = scmp.eq.s32.totalorder %s22, 0
      %p179 = por %p177, %p178
      %p180 = scmp.ne.s32.totalorder %s169, %s172
      %p181 = scmp.eq.s32.totalorder %s27, 3
      %p182 = por %p180, %p181
      %p183 = scmp.ne.s32.totalorder %s172, %s173
      %p184 = scmp.eq.s32.totalorder %s27, 0
      %p185 = por %p183, %p184
      %p186 = scmp.ne.s32.totalorder %s172, %s173
      %p187 = scmp.eq.s32.totalorder %s28, 3
      %p188 = por %p186, %p187
      %p190 = scmp.ne.s32.totalorder %s173, %s189
      %p191 = scmp.eq.s32.totalorder %s28, 0
      %p192 = por %p190, %p191
      %p193 = scmp.le.s32.totalorder 1, %s22
      %p194 = scmp.lt.s32.totalorder %s22, 5
      %p195 = pnand %p193, %p194
      %p196 = pneg %p195
      // Predicated region
      $region9: #{transformer_feed_forward.1} parent=5 // pred_check
        _
      $region10: #{transformer_feed_forward.1} parent=5 // pred_check_branch
        %198 = sbr.rel (%p195) target = $region12
      $region11: #{transformer_feed_forward.1} parent=5 // pred_region
        %s199 = ssub.s32 %s22, 1
        // Predicated region
        $region13: #{transformer_feed_forward.1} parent=11 // pred_check
          %p200 = pneg %p159
        $region14: #{transformer_feed_forward.1} parent=11 // pred_check_branch
          %202 = sbr.rel (%p200) target = $region16
        $region15: #{transformer_feed_forward.1} parent=11 // pred_region
          _
        $region16: #{transformer_feed_forward.1} parent=11 // pred_fallthru
          _
      $region12: #{transformer_feed_forward.1} parent=5 // pred_fallthru
        _
      %p203 = scmp.lt.s32.totalorder %s22, 4
      // Predicated region
      $region17: #{transformer_feed_forward.1} parent=5 // pred_check
        %p204 = pneg %p203
      $region18: #{transformer_feed_forward.1} parent=5 // pred_check_branch
        %206 = sbr.rel (%p204) target = $region20
      $region19: #{transformer_feed_forward.1} parent=5 // pred_region
        // Predicated region
        $region21: #{transformer_feed_forward.1} parent=19 // pred_check
          %p207 = pneg %p54
        $region22: #{transformer_feed_forward.1} parent=19 // pred_check_branch
          %209 = sbr.rel (%p207) target = $region24
        $region23: #{transformer_feed_forward.1} parent=19 // pred_region
          %s210 = sand.u32 %s44, 1
          %s211 = scalar_lea.sflag [#allocation6], %s210
          %s212 = sand.u32 %s44, 1
          %s213 = smul.addr %s212, 8
          %s214 = scalar_lea.vmem [#allocation5], %s213
          %s216 = ssub.s32 128, 128
          %217 = vsyncadd %s211, %s216
          %s218 = smul.addr %s29, 128
          %s219 = scalar_lea.hbm %s1, %s218
          %s221 = sshll.u32 %s214, 4
          %s222 = int_to_ptr.vmem [resolvable:$true] %s221
          %224 = dma.hbm_to_vmem [thread:$0]  %s219, 128, %s222, %s211
        $region24: #{transformer_feed_forward.1} parent=19 // pred_fallthru
          _
        // Predicated region
        $region25: #{transformer_feed_forward.1} parent=19 // pred_check
          %p225 = pneg %p80
        $region26: #{transformer_feed_forward.1} parent=19 // pred_check_branch
          %227 = sbr.rel (%p225) target = $region28
        $region27: #{transformer_feed_forward.1} parent=19 // pred_region
          %s228 = sand.u32 %s22, 1
          %s229 = scalar_lea.sflag [#allocation9], %s228
          %s230 = sand.u32 %s70, 1
          %s231 = smul.addr %s230, 128
          %s232 = scalar_lea.vmem [#allocation8], %s231
          %s234 = ssub.s32 2048, 2048
          %235 = vsyncadd %s229, %s234
          %s236 = smul.addr %s30, 128
          %s237 = scalar_lea.hbm %s2, %s236
          %s238 = sshll.u32 %s232, 4
          %s239 = int_to_ptr.vmem [resolvable:$true] %s238
          %244 = dma.hbm_to_vmem [thread:$0]  %s237, 2048, %s239, %s229, 256, 128, 8
        $region28: #{transformer_feed_forward.1} parent=19 // pred_fallthru
          _
        // Predicated region
        $region29: #{transformer_feed_forward.1} parent=19 // pred_check
          %p245 = pneg %p106
        $region30: #{transformer_feed_forward.1} parent=19 // pred_check_branch
          %247 = sbr.rel (%p245) target = $region32
        $region31: #{transformer_feed_forward.1} parent=19 // pred_region
          %p248 = scmp.lt.s32.totalorder %s30, 1
          %s249 = scalar_select %p248, %s30, 1
          %s250 = scalar_lea.vmem %s3, %s249
        $region32: #{transformer_feed_forward.1} parent=19 // pred_fallthru
          _
        // Predicated region
        $region33: #{transformer_feed_forward.1} parent=19 // pred_check
          %p251 = pneg %p132
        $region34: #{transformer_feed_forward.1} parent=19 // pred_check_branch
          %253 = sbr.rel (%p251) target = $region36
        $region35: #{transformer_feed_forward.1} parent=19 // pred_region
          %s254 = sand.u32 %s22, 1
          %s255 = scalar_lea.sflag [#allocation9], %s254
          %s256 = sand.u32 %s122, 1
          %s257 = smul.addr %s256, 128
          %s258 = scalar_lea.vmem [#allocation10], %s257
          %s259 = smul.u32 16, %s30
          %s261 = ssub.s32 2048, 2048
          %262 = vsyncadd %s255, %s261
          %s263 = smul.addr %s259, 128
          %s264 = scalar_lea.hbm %s4, %s263
          %s265 = sshll.u32 %s258, 4
          %s266 = int_to_ptr.vmem [resolvable:$true] %s265
          %271 = dma.hbm_to_vmem [thread:$0]  %s264, 2048, %s266, %s255, 128, 128, 8
        $region36: #{transformer_feed_forward.1} parent=19 // pred_fallthru
          _
      $region20: #{transformer_feed_forward.1} parent=5 // pred_fallthru
        _
      %p272 = scmp.le.s32.totalorder 1, %s22
      %p273 = scmp.lt.s32.totalorder %s22, 5
      %p274 = pnand %p272, %p273
      %p275 = pneg %p274
      // Predicated region
      $region37: #{transformer_feed_forward.1} parent=5 // pred_check
        _
      $region38: #{transformer_feed_forward.1} parent=5 // pred_check_branch
        %277 = sbr.rel (%p274) target = $region40
      $region39: #{transformer_feed_forward.1} parent=5 // pred_region
        %s278 = ssub.s32 %s22, 1
        %s279 = sand.u32 %s47, 1
        %s280 = scalar_lea.sflag [#allocation6], %s279
        %s281 = sand.u32 %s47, 1
        %s282 = smul.addr %s281, 8
        %s283 = scalar_lea.vmem [#allocation5], %s282
        // Predicated region
        $region41: #{transformer_feed_forward.1} parent=39 // pred_check
          %p284 = pneg %p60
        $region42: #{transformer_feed_forward.1} parent=39 // pred_check_branch
          %286 = sbr.rel (%p284) target = $region44
        $region43: #{transformer_feed_forward.1} parent=39 // pred_region
          %287 = dma.done %s280, 128
        $region44: #{transformer_feed_forward.1} parent=39 // pred_fallthru
          _
        %s288 = sand.u32 %s27, 1
        %s289 = scalar_lea.sflag [#allocation9], %s288
        %s290 = sand.u32 %s73, 1
        %s291 = smul.addr %s290, 128
        %s292 = scalar_lea.vmem [#allocation8], %s291
        // Predicated region
        $region45: #{transformer_feed_forward.1} parent=39 // pred_check
          %p293 = pneg %p86
        $region46: #{transformer_feed_forward.1} parent=39 // pred_check_branch
          %295 = sbr.rel (%p293) target = $region48
        $region47: #{transformer_feed_forward.1} parent=39 // pred_region
          %296 = dma.done %s289, 2048
        $region48: #{transformer_feed_forward.1} parent=39 // pred_fallthru
          _
        %s297 = sand.u32 %s27, 1
        %s298 = scalar_lea.sflag [#allocation9], %s297
        %s299 = sand.u32 %s125, 1
        %s300 = smul.addr %s299, 128
        %s301 = scalar_lea.vmem [#allocation10], %s300
        // Predicated region
        $region49: #{transformer_feed_forward.1} parent=39 // pred_check
          %p302 = pneg %p138
        $region50: #{transformer_feed_forward.1} parent=39 // pred_check_branch
          %304 = sbr.rel (%p302) target = $region52
        $region51: #{transformer_feed_forward.1} parent=39 // pred_region
          %305 = dma.done %s298, 2048
        $region52: #{transformer_feed_forward.1} parent=39 // pred_fallthru
          _
        %s306 = sand.u32 %s47, 1
        %s307 = scalar_lea.sflag [#allocation6], %s306
        %s308 = sand.u32 %s47, 1
        %s309 = smul.addr %s308, 8
        %s310 = scalar_lea.vmem [#allocation5], %s309
        %p311 = pneg %p60
        %p312 = pneg %p57
        %s313 = sand.u32 %s27, 1
        %s314 = scalar_lea.sflag [#allocation9], %s313
        %s315 = sand.u32 %s73, 1
        %s316 = smul.addr %s315, 128
        %s317 = scalar_lea.vmem [#allocation8], %s316
        %p318 = pneg %p86
        %p319 = pneg %p83
        %p320 = scmp.lt.s32.totalorder %s32, 1
        %s321 = scalar_select %p320, %s32, 1
        %s322 = scalar_lea.vmem %s3, %s321
        %p323 = pneg %p112
        %p324 = pneg %p109
        %s325 = sand.u32 %s27, 1
        %s326 = scalar_lea.sflag [#allocation9], %s325
        %s327 = sand.u32 %s125, 1
        %s328 = smul.addr %s327, 128
        %s329 = scalar_lea.vmem [#allocation10], %s328
        %p330 = pneg %p138
        %p331 = pneg %p135
        %p332 = pneg %p159
        %p333 = pneg %p156
        %p334 = pneg %p185
        %p335 = pneg %p182
        %s336 = sand.u32 %s172, 1
        %s337 = scalar_lea.sflag [#allocation7], %s336
        %s338 = sand.u32 %s172, 1
        %s339 = smul.addr %s338, 8
        %s340 = scalar_lea.vmem [#allocation11], %s339
        %p341 = scmp.lt.s32.totalorder %s32, 1
        %s342 = scalar_select %p341, %s32, 1
        %s343 = scalar_lea.vmem %s3, %s342
        %s344 = smul.u32 16, %s32
        %p345 = scmp.eq.s32.totalorder %s32, 0
        // Predicated region
        $region53: #{transformer_feed_forward.1} parent=39 // pred_check
          %p346 = pneg %p345
        $region54: #{transformer_feed_forward.1} parent=39 // pred_check_branch
          %348 = sbr.rel (%p346) target = $region56
        $region55: #{transformer_feed_forward.1} parent=39 // pred_region
          %v349 = vld [vmem:[%s5] sm:$0x1]
          %v351 = vlaneseq
          %v352 = vshrl.u32 %v351, 7
          %v353 = vsub.s32 0, %v352
          %v354 = vrot.slane %v349, %v353
          %356 = vst [vmem:[#allocation2] sm:$0xff] %v354
        $region56: #{transformer_feed_forward.1} parent=39 // pred_fallthru
          _
        %v357 = vld [vmem:[%s283] sm:$0xff]
        %v358 = vld [vmem:[%s292] sm:$0xff]
        %v359 = vld [vmem:[%s292 + $0x8] sm:$0xff]
        %v360 = vld [vmem:[%s292 + $0x10] sm:$0xff]
        %v361 = vld [vmem:[%s292 + $0x18] sm:$0xff]
        %v362 = vld [vmem:[%s292 + $0x20] sm:$0xff]
        %v363 = vld [vmem:[%s292 + $0x28] sm:$0xff]
        %v364 = vld [vmem:[%s292 + $0x30] sm:$0xff]
        %v365 = vld [vmem:[%s292 + $0x38] sm:$0xff]
        %v366 = vld [vmem:[%s292 + $0x40] sm:$0xff]
        %v367 = vld [vmem:[%s292 + $0x48] sm:$0xff]
        %v368 = vld [vmem:[%s292 + $0x50] sm:$0xff]
        %v369 = vld [vmem:[%s292 + $0x58] sm:$0xff]
        %v370 = vld [vmem:[%s292 + $0x60] sm:$0xff]
        %v371 = vld [vmem:[%s292 + $0x68] sm:$0xff]
        %v372 = vld [vmem:[%s292 + $0x70] sm:$0xff]
        %v373 = vld [vmem:[%s292 + $0x78] sm:$0xff]
        %v374 = vld [vmem:[%s343] sm:$0x1]
        %v376 = vlaneseq
        %v377 = vshrl.u32 %v376, 7
        %v378 = vsub.s32 0, %v377
        %v379 = vrot.slane %v374, %v378
        %381 = vmatprep.subr.mxu0 0.0
        %382 = vmatpush1.msra.mxu0 %v358
        %383 = vmatprep.subr.mxu0 0.0
        %384 = vmatpush1.msra.mxu0 %v359
        %385 = vmatprep.subr.mxu0 0.0
        %386 = vmatpush1.msra.mxu0 %v360
        %387 = vmatprep.subr.mxu0 0.0
        %388 = vmatpush1.msra.mxu0 %v361
        %389 = vmatprep.subr.mxu0 0.0
        %390 = vmatpush1.msra.mxu0 %v362
        %391 = vmatprep.subr.mxu0 0.0
        %392 = vmatpush1.msra.mxu0 %v363
        %393 = vmatprep.subr.mxu0 0.0
        %394 = vmatpush1.msra.mxu0 %v364
        %395 = vmatprep.subr.mxu0 0.0
        %396 = vmatpush1.msra.mxu0 %v365
        %397 = vmatprep.subr.mxu0 0.0
        %398 = vmatpush1.msra.mxu0 %v366
        %399 = vmatprep.subr.mxu0 0.0
        %400 = vmatpush1.msra.mxu0 %v367
        %401 = vmatprep.subr.mxu0 0.0
        %402 = vmatpush1.msra.mxu0 %v368
        %403 = vmatprep.subr.mxu0 0.0
        %404 = vmatpush1.msra.mxu0 %v369
        %405 = vmatprep.subr.mxu0 0.0
        %406 = vmatpush1.msra.mxu0 %v370
        %407 = vmatprep.subr.mxu0 0.0
        %408 = vmatpush1.msra.mxu0 %v371
        %409 = vmatprep.subr.mxu0 0.0
        %410 = vmatpush1.msra.mxu0 %v372
        %411 = vmatprep.subr.mxu0 0.0
        %412 = vmatpush1.msra.mxu0 %v373
        %413 = vmatprep.subr.mxu0 0.0
        %414 = vmatpush1.msra.mxu0 0.0
        %415 = vmatprep.subr.mxu0 0.0
        %416 = vmatpush1.msra.mxu0 0.0
        %417 = vmatprep.subr.mxu0 0.0
        %418 = vmatpush1.msra.mxu0 0.0
        %419 = vmatprep.subr.mxu0 0.0
        %420 = vmatpush1.msra.mxu0 0.0
        %421 = vmatprep.subr.mxu0 0.0
        %422 = vmatpush1.msra.mxu0 0.0
        %423 = vmatprep.subr.mxu0 0.0
        %424 = vmatpush1.msra.mxu0 0.0
        %425 = vmatprep.subr.mxu0 0.0
        %426 = vmatpush1.msra.mxu0 0.0
        %427 = vmatprep.subr.mxu0 0.0
        %428 = vmatpush1.msra.mxu0 0.0
        %429 = vmatprep.subr.mxu0 0.0
        %430 = vmatpush1.msra.mxu0 0.0
        %431 = vmatprep.subr.mxu0 0.0
        %432 = vmatpush1.msra.mxu0 0.0
        %433 = vmatprep.subr.mxu0 0.0
        %434 = vmatpush1.msra.mxu0 0.0
        %435 = vmatprep.subr.mxu0 0.0
        %436 = vmatpush1.msra.mxu0 0.0
        %437 = vmatprep.subr.mxu0 0.0
        %438 = vmatpush1.msra.mxu0 0.0
        %439 = vmatprep.subr.mxu0 0.0
        %440 = vmatpush1.msra.mxu0 0.0
        %441 = vmatprep.subr.mxu0 0.0
        %442 = vmatpush1.msra.mxu0 0.0
        %443 = vmatprep.subr.mxu0 0.0
        %444 = vmatpush1.msra.mxu0 0.0
        %445 = vmatprep.mubr.f32.mxu0 0.0
        %446 = vmatmul.mubr.f32.gmra.mrb[0].mxu0 %v357
        %v447 = vpop.f32.mrb[0].mxu0
        %v448 = vadd.f32 %v379, %v447
        %v449 = vpop.f32.mrb[0].mxu0
        %450 = vdwg.mxu0
        %v451 = vmax.f32 %v448, 0.0
        %v452 = vld [vmem:[#allocation2] sm:$0xff]
        %v453 = vld [vmem:[%s301] sm:$0xff]
        %v454 = vld [vmem:[%s301 + $0x8] sm:$0xff]
        %v455 = vld [vmem:[%s301 + $0x10] sm:$0xff]
        %v456 = vld [vmem:[%s301 + $0x18] sm:$0xff]
        %v457 = vld [vmem:[%s301 + $0x20] sm:$0xff]
        %v458 = vld [vmem:[%s301 + $0x28] sm:$0xff]
        %v459 = vld [vmem:[%s301 + $0x30] sm:$0xff]
        %v460 = vld [vmem:[%s301 + $0x38] sm:$0xff]
        %v461 = vld [vmem:[%s301 + $0x40] sm:$0xff]
        %v462 = vld [vmem:[%s301 + $0x48] sm:$0xff]
        %v463 = vld [vmem:[%s301 + $0x50] sm:$0xff]
        %v464 = vld [vmem:[%s301 + $0x58] sm:$0xff]
        %v465 = vld [vmem:[%s301 + $0x60] sm:$0xff]
        %v466 = vld [vmem:[%s301 + $0x68] sm:$0xff]
        %v467 = vld [vmem:[%s301 + $0x70] sm:$0xff]
        %v468 = vld [vmem:[%s301 + $0x78] sm:$0xff]
        %469 = vmatprep.subr.mxu0 0.0
        %470 = vmatpush1.msra.mxu0 %v453
        %471 = vmatprep.subr.mxu0 0.0
        %472 = vmatpush1.msra.mxu0 %v454
        %473 = vmatprep.subr.mxu0 0.0
        %474 = vmatpush1.msra.mxu0 %v455
        %475 = vmatprep.subr.mxu0 0.0
        %476 = vmatpush1.msra.mxu0 %v456
        %477 = vmatprep.subr.mxu0 0.0
        %478 = vmatpush1.msra.mxu0 %v457
        %479 = vmatprep.subr.mxu0 0.0
        %480 = vmatpush1.msra.mxu0 %v458
        %481 = vmatprep.subr.mxu0 0.0
        %482 = vmatpush1.msra.mxu0 %v459
        %483 = vmatprep.subr.mxu0 0.0
        %484 = vmatpush1.msra.mxu0 %v460
        %485 = vmatprep.subr.mxu0 0.0
        %486 = vmatpush1.msra.mxu0 %v461
        %487 = vmatprep.subr.mxu0 0.0
        %488 = vmatpush1.msra.mxu0 %v462
        %489 = vmatprep.subr.mxu0 0.0
        %490 = vmatpush1.msra.mxu0 %v463
        %491 = vmatprep.subr.mxu0 0.0
        %492 = vmatpush1.msra.mxu0 %v464
        %493 = vmatprep.subr.mxu0 0.0
        %494 = vmatpush1.msra.mxu0 %v465
        %495 = vmatprep.subr.mxu0 0.0
        %496 = vmatpush1.msra.mxu0 %v466
        %497 = vmatprep.subr.mxu0 0.0
        %498 = vmatpush1.msra.mxu0 %v467
        %499 = vmatprep.subr.mxu0 0.0
        %500 = vmatpush1.msra.mxu0 %v468
        %501 = vmatprep.subr.mxu0 0.0
        %502 = vmatpush1.msra.mxu0 0.0
        %503 = vmatprep.subr.mxu0 0.0
        %504 = vmatpush1.msra.mxu0 0.0
        %505 = vmatprep.subr.mxu0 0.0
        %506 = vmatpush1.msra.mxu0 0.0
        %507 = vmatprep.subr.mxu0 0.0
        %508 = vmatpush1.msra.mxu0 0.0
        %509 = vmatprep.subr.mxu0 0.0
        %510 = vmatpush1.msra.mxu0 0.0
        %511 = vmatprep.subr.mxu0 0.0
        %512 = vmatpush1.msra.mxu0 0.0
        %513 = vmatprep.subr.mxu0 0.0
        %514 = vmatpush1.msra.mxu0 0.0
        %515 = vmatprep.subr.mxu0 0.0
        %516 = vmatpush1.msra.mxu0 0.0
        %517 = vmatprep.subr.mxu0 0.0
        %518 = vmatpush1.msra.mxu0 0.0
        %519 = vmatprep.subr.mxu0 0.0
        %520 = vmatpush1.msra.mxu0 0.0
        %521 = vmatprep.subr.mxu0 0.0
        %522 = vmatpush1.msra.mxu0 0.0
        %523 = vmatprep.subr.mxu0 0.0
        %524 = vmatpush1.msra.mxu0 0.0
        %525 = vmatprep.subr.mxu0 0.0
        %526 = vmatpush1.msra.mxu0 0.0
        %527 = vmatprep.subr.mxu0 0.0
        %528 = vmatpush1.msra.mxu0 0.0
        %529 = vmatprep.subr.mxu0 0.0
        %530 = vmatpush1.msra.mxu0 0.0
        %531 = vmatprep.subr.mxu0 0.0
        %532 = vmatpush1.msra.mxu0 0.0
        %533 = vmatprep.mubr.f32.mxu0 0.0
        %534 = vmatmul.mubr.f32.gmra.mrb[0].mxu0 %v451
        %v535 = vpop.f32.mrb[0].mxu0
        %v536 = vadd.f32 0.0, %v535
        %v537 = vpop.f32.mrb[0].mxu0
        %538 = vdwg.mxu0
        %v539 = vadd.f32 %v452, %v536
        %540 = vst [vmem:[#allocation2] sm:$0xff] %v539
        %p541 = scmp.eq.s32.totalorder %s32, 1
        // Predicated region
        $region57: #{transformer_feed_forward.1} parent=39 // pred_check
          %p542 = pneg %p541
        $region58: #{transformer_feed_forward.1} parent=39 // pred_check_branch
          %544 = sbr.rel (%p542) target = $region60
        $region59: #{transformer_feed_forward.1} parent=39 // pred_region
          %v545 = vld [vmem:[#allocation2] sm:$0xff]
          %546 = vst [vmem:[%s340] sm:$0xff] %v545
        $region60: #{transformer_feed_forward.1} parent=39 // pred_fallthru
          _
        %s547 = sand.u32 %s172, 1
        %s548 = scalar_lea.sflag [#allocation7], %s547
        %s549 = sand.u32 %s172, 1
        %s550 = smul.addr %s549, 8
        %s551 = scalar_lea.vmem [#allocation11], %s550
        // Predicated region
        $region61: #{transformer_feed_forward.1} parent=39 // pred_check
          %p552 = pneg %p182
        $region62: #{transformer_feed_forward.1} parent=39 // pred_check_branch
          %554 = sbr.rel (%p552) target = $region64
        $region63: #{transformer_feed_forward.1} parent=39 // pred_region
          %s556 = ssub.s32 128, 128
          %557 = vsyncadd %s548, %s556
          %s558 = smul.addr %s31, 128
          %s559 = scalar_lea.hbm %s6, %s558
          %s561 = sshll.u32 %s551, 4
          %s562 = int_to_ptr.vmem [resolvable:$true] %s561
          %564 = dma.vmem_to_hbm [thread:$0]  %s562, 128, %s559, %s548
        $region64: #{transformer_feed_forward.1} parent=39 // pred_fallthru
          _
      $region40: #{transformer_feed_forward.1} parent=5 // pred_fallthru
        _
      %p565 = scmp.le.s32.totalorder 2, %s22
      // Predicated region
      $region65: #{transformer_feed_forward.1} parent=5 // pred_check
        %p566 = pneg %p565
      $region66: #{transformer_feed_forward.1} parent=5 // pred_check_branch
        %568 = sbr.rel (%p566) target = $region68
      $region67: #{transformer_feed_forward.1} parent=5 // pred_region
        %s569 = ssub.s32 %s22, 2
        // Predicated region
        $region69: #{transformer_feed_forward.1} parent=67 // pred_check
          %p570 = pneg %p188
        $region70: #{transformer_feed_forward.1} parent=67 // pred_check_branch
          %572 = sbr.rel (%p570) target = $region72
        $region71: #{transformer_feed_forward.1} parent=67 // pred_region
          %s573 = sand.u32 %s173, 1
          %s574 = scalar_lea.sflag [#allocation7], %s573
          %s575 = sand.u32 %s173, 1
          %s576 = smul.addr %s575, 8
          %s577 = scalar_lea.vmem [#allocation11], %s576
          %578 = dma.done %s574, 128
        $region72: #{transformer_feed_forward.1} parent=67 // pred_fallthru
          _
      $region68: #{transformer_feed_forward.1} parent=5 // pred_fallthru
        _
    $region6: #{transformer_feed_forward.1} parent=1 // loop_footer
      %s26 = sadd.s32 1, %s22
    $region7: #{transformer_feed_forward.1} parent=1 // loop_footer_branch
      %21 = sbr.rel target = $region3
    $region8: #{transformer_feed_forward.1} parent=1 // loop_exit
      _
    %579 = vsyncpa [#allocation6], 1
    %s580 = scalar_lea.sflag [#allocation6], 1
    %581 = vsyncpa %s580, 1
    %582 = vsyncpa [#allocation9], 1
    %s583 = scalar_lea.sflag [#allocation9], 1
    %584 = vsyncpa %s583, 1
    %585 = vsyncpa [#allocation7], 1
    %s586 = scalar_lea.sflag [#allocation7], 1
    %587 = vsyncpa %s586, 1

</llo_original>
